<compile_context>
chip_gen: v5e
topology: v5e:2x2
jax: 0.10.0
libtpu: 0.0.40
codegen_flags: <defaults>
</compile_context>

<pallas_src>
import functools

import jax
import jax.numpy as jnp
from jax.experimental import pallas as pl
from jax.experimental.pallas import tpu as pltpu

_LANES = 128


def _spatial_sum(x_ref, hw):
    """Sum over the last (spatial) axis of the x tile.

    When the extent is a multiple of 128 lanes (and the unroll is modest), do
    the bulk of the reduction as VPU adds over static 128-lane slices and
    finish with a single cross-lane reduce, instead of lane-reducing the full
    tile on the XLU.
    """
    nsub = hw // _LANES
    if hw % _LANES == 0 and 1 < nsub <= 128:
        partial = x_ref[:, :, 0:_LANES].astype(jnp.float32)
        for j in range(1, nsub):
            partial = partial + x_ref[:, :, j * _LANES:(j + 1) * _LANES].astype(jnp.float32)
        return jnp.sum(partial, axis=-1)
    return jnp.sum(x_ref[...].astype(jnp.float32), axis=-1)


def _mlp_head(pooled, w1_ref, b1_ref, w2_ref, b2_ref, out_ref):
    """pooled: (nt, C) f32  ->  out_ref: (1, nt, 128) lane-padded logits."""
    h = jnp.dot(pooled, w1_ref[...], preferred_element_type=jnp.float32)
    h = jnp.maximum(h + b1_ref[...], 0.0)                  # Linear(C,256) + ReLU
    out = jnp.dot(h, w2_ref[...], preferred_element_type=jnp.float32)
    out = out + b2_ref[...]                                 # Linear(256,2), lane-padded
    out_ref[...] = out[None].astype(out_ref.dtype)


def _dc_single_kernel(x_ref, w1_ref, b1_ref, w2_ref, b2_ref, out_ref, *, hw, inv_hw):
    """Whole spatial extent in one tile: pool + MLP, no accumulator needed."""
    pooled = _spatial_sum(x_ref, hw) * inv_hw               # AdaptiveAvgPool2d(1)+Flatten
    _mlp_head(pooled, w1_ref, b1_ref, w2_ref, b2_ref, out_ref)


def _dc_multi_kernel(x_ref, w1_ref, b1_ref, w2_ref, b2_ref, out_ref, acc_ref,
                     *, hw, st, n_spatial, needs_mask, inv_hw):
    """grid = (batch tiles, spatial chunks); the reduction (spatial) axis is last."""
    k = pl.program_id(1)
    last = pl.num_programs(1) - 1
    nsub = st // _LANES

    @pl.when(k == 0)
    def _init():
        acc_ref[...] = jnp.zeros_like(acc_ref)

    def _accumulate(masked):
        # Lane-preserving partial sums: plain VPU adds over static 128-lane
        # slices into the (nt, C, 128) accumulator; no per-chunk XLU work.
        partial = None
        if masked:
            base = (n_spatial - 1) * st                      # static: last chunk offset
            lane = jax.lax.broadcasted_iota(jnp.int32, (1, 1, _LANES), 2)
        for j in range(nsub):
            if masked:
                lo = base + j * _LANES
                if lo >= hw:
                    break                                    # pure padding beyond hw
            xs = x_ref[:, :, j * _LANES:(j + 1) * _LANES].astype(jnp.float32)
            if masked and lo + _LANES > hw:
                xs = jnp.where(lo + lane < hw, xs, 0.0)      # zero the overhang
            partial = xs if partial is None else partial + xs
        acc_ref[...] += partial

    def _finalize():
        # One cross-lane reduce + relayout per batch tile, then the MLP head.
        pooled = jnp.sum(acc_ref[...], axis=-1) * inv_hw
        _mlp_head(pooled, w1_ref, b1_ref, w2_ref, b2_ref, out_ref)

    if needs_mask:
        @pl.when(k != last)
        def _():
            _accumulate(False)

        @pl.when(k == last)
        def _():
            _accumulate(True)
            _finalize()
    else:
        _accumulate(False)

        @pl.when(k == last)
        def _():
            _finalize()


def domain_classifier(x, w1, b1, w2, b2, alpha=1.0, *, nt=None, st=None):
    """DomainClassifier forward.  x: (N, C, H, W) -> (N, 2) float32 logits."""
    del alpha  # TODO(synk): alpha only scales the reversed gradient (backward pass).
    N, C, H, W = x.shape
    hw = H * W
    x3 = x.reshape(N, C, hw)                 # free reshape; NCHW kept (no transpose)
    itemsize = x.dtype.itemsize

    # --- generation-aware VMEM capacity ---------------------------------------
    try:
        vmem_cap = int(pltpu.get_tpu_info().vmem_capacity_bytes)
    except Exception:
        vmem_cap = 64 << 20                  # conservative (v7x-sized) fallback
    x_db_budget = vmem_cap // 4              # target for x's double buffer

    # --- batch tile: >= 2 tiles whenever N >= 2 (keeps both v7x TCs busy) -----
    if nt is None:
        nt = 8 if N >= 16 else max(1, pl.cdiv(N, 2))
        # Shrink nt if even a minimal 128-lane spatial chunk would overflow the
        # x double-buffer budget (very large C).
        nt = min(nt, max(1, x_db_budget // (2 * C * _LANES * itemsize)))
    nt = max(1, min(int(nt), N))
    n_batch = pl.cdiv(N, nt)

    # --- spatial tile: as large as the VMEM budget allows ---------------------
    bytes_per_lane = nt * C * itemsize
    if st is not None:                        # explicit override (tests / tuning)
        st_eff = hw if st >= hw else max((int(st) // _LANES) * _LANES, _LANES)
    elif 2 * bytes_per_lane * hw <= x_db_budget:
        st_eff = hw                           # whole slab fits -> one spatial step
    else:
        st_max = x_db_budget // (2 * bytes_per_lane)
        st_eff = max((st_max // _LANES) * _LANES, _LANES)
        st_eff = min(st_eff, 128 * _LANES)    # keep the in-kernel unroll modest
    if st_eff >= hw:
        st_eff = hw
        single_step = True
    else:
        single_step = False
    needs_mask = (not single_step) and (hw % st_eff != 0)
    n_spatial = 1 if single_step else pl.cdiv(hw, st_eff)
    inv_hw = 1.0 / float(hw)

    # --- weights: lane-pad the 2-wide logits head ------------------------------
    hidden = w1.shape[1]
    nout = w2.shape[1]
    nout_pad = _LANES
    w2p = jnp.zeros((hidden, nout_pad), w2.dtype).at[:, :nout].set(w2)
    b2p = jnp.zeros((1, nout_pad), b2.dtype).at[:, :nout].set(jnp.reshape(b2, (1, nout)))
    b1r = jnp.reshape(b1, (1, hidden))

    # --- VMEM budget / advisory cost -------------------------------------------
    x_tile_b = nt * C * st_eff * itemsize
    w_bytes = (C * hidden * w1.dtype.itemsize + hidden * b1r.dtype.itemsize
               + hidden * nout_pad * w2p.dtype.itemsize + nout_pad * b2p.dtype.itemsize)
    out_tile_b = nt * nout_pad * 4
    acc_b = 0 if single_step else nt * max(C, 8) * _LANES * 4
    computed = 2 * x_tile_b + 2 * w_bytes + 2 * out_tile_b + acc_b + (4 << 20)
    cap = vmem_cap // 2                        # headroom, esp. on v7x's 64 MiB VMEM
    vmem_limit = int(min(max(computed, 16 << 20), max(cap, computed)))

    flops = 2 * N * C * hw + 2 * N * C * hidden + 2 * N * hidden * nout_pad
    bytes_accessed = int(x3.size * itemsize + w_bytes + n_batch * nt * nout_pad * 4)

    # --- specs ------------------------------------------------------------------
    if single_step:
        kernel = functools.partial(_dc_single_kernel, hw=hw, inv_hw=inv_hw)
        grid = (n_batch,)
        in_specs = [
            pl.BlockSpec((nt, C, hw), lambda i: (i, 0, 0)),            # x tile
            pl.BlockSpec((C, hidden), lambda i: (0, 0)),               # resident weights
            pl.BlockSpec((1, hidden), lambda i: (0, 0)),
            pl.BlockSpec((hidden, nout_pad), lambda i: (0, 0)),
            pl.BlockSpec((1, nout_pad), lambda i: (0, 0)),
        ]
        out_specs = pl.BlockSpec((1, nt, nout_pad), lambda i: (i, 0, 0))
        scratch_shapes = []
        dims = ("parallel",)
    else:
        kernel = functools.partial(_dc_multi_kernel, hw=hw, st=st_eff,
                                   n_spatial=int(n_spatial),
                                   needs_mask=needs_mask, inv_hw=inv_hw)
        grid = (n_batch, n_spatial)
        in_specs = [
            pl.BlockSpec((nt, C, st_eff), lambda i, k: (i, 0, k)),     # streamed x
            pl.BlockSpec((C, hidden), lambda i, k: (0, 0)),            # resident weights
            pl.BlockSpec((1, hidden), lambda i, k: (0, 0)),
            pl.BlockSpec((hidden, nout_pad), lambda i, k: (0, 0)),
            pl.BlockSpec((1, nout_pad), lambda i, k: (0, 0)),
        ]
        # Same output block across the reduction axis -> resident, written once.
        out_specs = pl.BlockSpec((1, nt, nout_pad), lambda i, k: (i, 0, 0))
        scratch_shapes = [pltpu.VMEM((nt, C, _LANES), jnp.float32)]
        dims = ("parallel", "arbitrary")

    out_pad = pl.pallas_call(
        kernel,
        out_shape=jax.ShapeDtypeStruct((n_batch, nt, nout_pad), jnp.float32),
        grid_spec=pltpu.PrefetchScalarGridSpec(
            num_scalar_prefetch=0,
            grid=grid,
            in_specs=in_specs,
            out_specs=out_specs,
            scratch_shapes=scratch_shapes,
        ),
        compiler_params=pltpu.CompilerParams(
            dimension_semantics=dims,
            vmem_limit_bytes=vmem_limit,
        ),
        cost_estimate=pl.CostEstimate(
            flops=int(flops), transcendentals=0, bytes_accessed=bytes_accessed),
    )(x3, w1, b1r, w2p, b2p)

    return out_pad.reshape(n_batch * nt, nout_pad)[:N, :nout]


def init_params(key, ch, hidden=256, n_out=2):
    """Deterministic synthetic parameters (torch.nn.Linear-like init bounds)."""
    k1, k2, k3, k4 = jax.random.split(key, 4)
    bound1 = 1.0 / jnp.sqrt(ch)
    bound2 = 1.0 / jnp.sqrt(hidden)
    w1 = jax.random.uniform(k1, (ch, hidden), jnp.float32, -bound1, bound1)
    b1 = jax.random.uniform(k2, (1, hidden), jnp.float32, -bound1, bound1)
    w2 = jax.random.uniform(k3, (hidden, n_out), jnp.float32, -bound2, bound2)
    b2 = jax.random.uniform(k4, (1, n_out), jnp.float32, -bound2, bound2)
    return w1, b1, w2, b2


def reference_forward(x, w1, b1, w2, b2):
    pooled = jnp.mean(x, axis=(2, 3))              # (N, C)
    h = jnp.maximum(pooled @ w1 + b1, 0.0)         # (N, 256)
    return h @ w2 + b2                             # (N, 2)


if __name__ == "__main__":
    key = jax.random.PRNGKey(0)
    kx, kp, kx2, kx3 = jax.random.split(key, 4)

    C = 4
    w1, b1, w2, b2 = init_params(kp, C)

    # 1) Main shape, auto tiling (single spatial step, 2 batch tiles for v7x).
    x = jax.random.normal(kx, (2, C, 16, 16), jnp.float32)
    out = jax.block_until_ready(domain_classifier(x, w1, b1, w2, b2, alpha=1.0))
    ref = reference_forward(x, w1, b1, w2, b2)
    assert out.shape == (2, 2)
    assert jnp.allclose(out, ref, atol=2e-5, rtol=2e-5)

    # 2) Forced multi-step spatial reduction (accumulate / finalize path).
    out = jax.block_until_ready(domain_classifier(x, w1, b1, w2, b2, st=128))
    assert jnp.allclose(out, ref, atol=2e-5, rtol=2e-5)

    # 3) Multi-step with a remainder spatial chunk (masked last chunk).
    xr = jax.random.normal(kx2, (2, C, 16, 12), jnp.float32)
    out = jax.block_until_ready(domain_classifier(xr, w1, b1, w2, b2, st=128))
    refr = reference_forward(xr, w1, b1, w2, b2)
    assert jnp.allclose(out, refr, atol=2e-5, rtol=2e-5)

    # 4) Odd batch (padded rows in the last batch tile are sliced off).
    xo = jax.random.normal(kx3, (3, C, 8, 8), jnp.float32)
    out = jax.block_until_ready(domain_classifier(xo, w1, b1, w2, b2))
    refo = reference_forward(xo, w1, b1, w2, b2)
    assert out.shape == (3, 2)
    assert jnp.allclose(out, refo, atol=2e-5, rtol=2e-5)

    print("KERNEL_OK")
</pallas_src>

<mosaic_0001>
module attributes {stable_mosaic.version = 11 : i64} {
  func.func @_dc_single_kernel(%arg0: i32, %arg1: memref<1x4x256xf32, #tpu.memory_space<vmem>>, %arg2: memref<4x256xf32, #tpu.memory_space<vmem>>, %arg3: memref<1x256xf32, #tpu.memory_space<vmem>>, %arg4: memref<256x128xf32, #tpu.memory_space<vmem>>, %arg5: memref<1x128xf32, #tpu.memory_space<vmem>>, %arg6: memref<1x1x128xf32, #tpu.memory_space<vmem>>) attributes {dimension_semantics = [#tpu.dimension_semantics<parallel>], iteration_bounds = array<i64: 2>, scalar_prefetch = 0 : i64, scratch_operands = 0 : i64, tpu.core_type = #tpu.core_type<tc>, window_params = [{transform_indices = @transform_0, window_bounds = array<i64: 1, 4, 256>}, {pipeline_mode = #tpu.pipeline_mode<synchronous>, transform_indices = @transform_1, window_bounds = array<i64: 4, 256>}, {pipeline_mode = #tpu.pipeline_mode<synchronous>, transform_indices = @transform_2, window_bounds = array<i64: 1, 256>}, {pipeline_mode = #tpu.pipeline_mode<synchronous>, transform_indices = @transform_3, window_bounds = array<i64: 256, 128>}, {pipeline_mode = #tpu.pipeline_mode<synchronous>, transform_indices = @transform_4, window_bounds = array<i64: 1, 128>}, {transform_indices = @transform_5, window_bounds = array<i64: 1, 1, 128>}]} {
    %c0 = arith.constant 0 : index
    %c0_0 = arith.constant 0 : index
    %c0_1 = arith.constant 0 : index
    %0 = vector.load %arg1[%c0, %c0_0, %c0_1] : memref<1x4x256xf32, #tpu.memory_space<vmem>>, vector<1x4x128xf32>
    %c0_2 = arith.constant 0 : index
    %c0_3 = arith.constant 0 : index
    %c128 = arith.constant 128 : index
    %1 = vector.load %arg1[%c0_2, %c0_3, %c128] : memref<1x4x256xf32, #tpu.memory_space<vmem>>, vector<1x4x128xf32>
    %2 = arith.addf %0, %1 : vector<1x4x128xf32>
    %cst = arith.constant dense<0.000000e+00> : vector<1x4xf32>
    %3 = vector.multi_reduction <add>, %2, %cst [2] : vector<1x4x128xf32> to vector<1x4xf32>
    %cst_4 = arith.constant 3.906250e-03 : f32
    %4 = vector.broadcast %cst_4 : f32 to vector<1x4xf32>
    %5 = arith.mulf %3, %4 : vector<1x4xf32>
    %c0_5 = arith.constant 0 : index
    %c0_6 = arith.constant 0 : index
    %6 = vector.load %arg2[%c0_5, %c0_6] : memref<4x256xf32, #tpu.memory_space<vmem>>, vector<4x256xf32>
    %cst_7 = arith.constant dense<0.000000e+00> : vector<1x256xf32>
    %7 = tpu.matmul %5, %6, %cst_7 {dimension_numbers = #tpu.dot_dimension_numbers<[1], [0], [0], [1], [0, 0, 1, 1], [], []>} : vector<1x4xf32>, vector<4x256xf32>, vector<1x256xf32> -> vector<1x256xf32>
    %c0_8 = arith.constant 0 : index
    %c0_9 = arith.constant 0 : index
    %8 = vector.load %arg3[%c0_8, %c0_9] : memref<1x256xf32, #tpu.memory_space<vmem>>, vector<1x256xf32>
    %9 = arith.addf %7, %8 : vector<1x256xf32>
    %cst_10 = arith.constant 0.000000e+00 : f32
    %10 = vector.broadcast %cst_10 : f32 to vector<1x256xf32>
    %11 = arith.maximumf %9, %10 : vector<1x256xf32>
    %c0_11 = arith.constant 0 : index
    %c0_12 = arith.constant 0 : index
    %12 = vector.load %arg4[%c0_11, %c0_12] : memref<256x128xf32, #tpu.memory_space<vmem>>, vector<256x128xf32>
    %cst_13 = arith.constant dense<0.000000e+00> : vector<1x128xf32>
    %13 = tpu.matmul %11, %12, %cst_13 {dimension_numbers = #tpu.dot_dimension_numbers<[1], [0], [0], [1], [0, 0, 1, 1], [], []>} : vector<1x256xf32>, vector<256x128xf32>, vector<1x128xf32> -> vector<1x128xf32>
    %c0_14 = arith.constant 0 : index
    %c0_15 = arith.constant 0 : index
    %14 = vector.load %arg5[%c0_14, %c0_15] : memref<1x128xf32, #tpu.memory_space<vmem>>, vector<1x128xf32>
    %15 = arith.addf %13, %14 : vector<1x128xf32>
    %16 = vector.shape_cast %15 : vector<1x128xf32> to vector<1x1x128xf32>
    %c0_16 = arith.constant 0 : index
    %c0_17 = arith.constant 0 : index
    %c0_18 = arith.constant 0 : index
    %17 = vector.load %arg6[%c0_16, %c0_17, %c0_18] : memref<1x1x128xf32, #tpu.memory_space<vmem>>, vector<1x1x128xf32>
    tpu.vector_store %arg6[%c0_16, %c0_17, %c0_18], %16 {strides = array<i32>} : memref<1x1x128xf32, #tpu.memory_space<vmem>>, vector<1x1x128xf32>,
    return
  }
  func.func @transform_0(%arg0: i32) -> (i32, i32, i32) {
    %c0_i32 = arith.constant 0 : i32
    %c0_i32_0 = arith.constant 0 : i32
    %c0_i32_1 = arith.constant 0 : i32
    return %arg0, %c0_i32, %c0_i32_0 : i32, i32, i32
  }
  func.func @transform_1(%arg0: i32) -> (i32, i32) {
    %c0_i32 = arith.constant 0 : i32
    %c0_i32_0 = arith.constant 0 : i32
    %c0_i32_1 = arith.constant 0 : i32
    return %c0_i32, %c0_i32_0 : i32, i32
  }
  func.func @transform_2(%arg0: i32) -> (i32, i32) {
    %c0_i32 = arith.constant 0 : i32
    %c0_i32_0 = arith.constant 0 : i32
    %c0_i32_1 = arith.constant 0 : i32
    return %c0_i32, %c0_i32_0 : i32, i32
  }
  func.func @transform_3(%arg0: i32) -> (i32, i32) {
    %c0_i32 = arith.constant 0 : i32
    %c0_i32_0 = arith.constant 0 : i32
    %c0_i32_1 = arith.constant 0 : i32
    return %c0_i32, %c0_i32_0 : i32, i32
  }
  func.func @transform_4(%arg0: i32) -> (i32, i32) {
    %c0_i32 = arith.constant 0 : i32
    %c0_i32_0 = arith.constant 0 : i32
    %c0_i32_1 = arith.constant 0 : i32
    return %c0_i32, %c0_i32_0 : i32, i32
  }
  func.func @transform_5(%arg0: i32) -> (i32, i32, i32) {
    %c0_i32 = arith.constant 0 : i32
    %c0_i32_0 = arith.constant 0 : i32
    %c0_i32_1 = arith.constant 0 : i32
    return %arg0, %c0_i32, %c0_i32_0 : i32, i32, i32
  }
}

</mosaic_0001>

<llo_original>
// kernel: tpu_custom_call.1
$region0: #{tpu_custom_call.1}
  #allocation0 [shape = 'u32[]', space=smem, size = 0x4, offset = 0x4, fixed_abs, tag = 'smem constant byte address 0x4 - core index']
  #allocation1 [shape = 'u32[72,128]{1,0:T(1,128)}', space=vmem, size = 0x9000, scoped, tag = 'internal scratch']
  %s0 = inlined_call_operand.hbm [shape: f32[2,4,256], index: 0, kind: input, shape index: {}]
  %s1 = inlined_call_operand.hbm [shape: f32[4,256], index: 1, kind: input, shape index: {}]
  %s2 = inlined_call_operand.hbm [shape: f32[1,256], index: 2, kind: input, shape index: {}]
  %s3 = inlined_call_operand.hbm [shape: f32[256,128], index: 3, kind: input, shape index: {}]
  %s4 = inlined_call_operand.vmem [shape: f32[1,128], index: 4, kind: input, shape index: {}]
  %s5 = inlined_call_operand.hbm [shape: f32[2,1,128], index: 5, kind: output, shape index: {}]
  %s6 = sld [smem:[#allocation0]]
  $region69: #{tpu_custom_call.1} parent=0
    _
  %s8 = ssub.s32 1, %s6
  %s9 = scalar_select 0, %s8, %s6
  $region1: #{tpu_custom_call.1} parent=0
    #allocation2 [shape = 'u8[8192]{0}', space=vmem, size = 0x2000, scoped, tag = 'input window, operand 0']
    #allocation3 [shape = 's32[2]{0}', space=sflag, size = 0x8, scoped, tag = 'scoped memory for tpu_custom_call.1']
    #allocation4 [shape = 's32[2]{0}', space=sflag, size = 0x8, scoped, tag = 'scoped memory for tpu_custom_call.1']
    #allocation5 [shape = 'u8[4096]{0}', space=vmem, size = 0x1000, scoped, tag = 'input window, operand 1, single buffered']
    #allocation6 [shape = 's32[1]{0}', space=sflag, size = 0x4, scoped, tag = 'scoped memory for tpu_custom_call.1']
    #allocation7 [shape = 'u8[1024]{0}', space=vmem, size = 0x400, scoped, tag = 'input window, operand 2, single buffered']
    #allocation8 [shape = 'u8[131072]{0}', space=vmem, size = 0x20000, scoped, tag = 'input window, operand 3, single buffered']
    #allocation9 [shape = 's32[1]{0}', space=sflag, size = 0x4, scoped, tag = 'scoped memory for tpu_custom_call.1']
    #allocation10 [shape = 'u8[1024]{0}', space=vmem, size = 0x400, scoped, tag = 'output window, operand 0']
    %10 = vsyncpa [#allocation3], 0
    %s11 = scalar_lea.sflag [#allocation3], 1
    %12 = vsyncpa %s11, 0
    %13 = vsyncpa [#allocation6], 0
    %14 = vsyncpa [#allocation9], 0
    %15 = vsyncpa [#allocation4], 0
    %s16 = scalar_lea.sflag [#allocation4], 1
    %17 = vsyncpa %s16, 0
    loop: start=0, step=1, limit=4
    $region2: #{tpu_custom_call.1} parent=1 // loop_pre_header
      _
    $region3: #{tpu_custom_call.1} parent=1 // loop_header
      %s19 = sphi 0, %s23
      %p20 = scmp.ge.s32.totalorder %s19, 4
      %s29 = sphi 0, %s31
      %s32 = sphi 0, %s29
      %s33 = sphi 0, %s32
      %s49 = sphi 0, %s33
      %s53 = sphi 0, %s53
      %s55 = sphi 0, %s53
      %s56 = sphi 0, %s55
      %s70 = sphi 0, %s56
      %s74 = sphi 0, %s74
      %s76 = sphi 0, %s74
      %s77 = sphi 0, %s76
      %s91 = sphi 0, %s77
      %s95 = sphi 0, %s95
      %s97 = sphi 0, %s95
      %s98 = sphi 0, %s97
      %s112 = sphi 0, %s98
      %s116 = sphi 0, %s116
      %s118 = sphi 0, %s116
      %s119 = sphi 0, %s118
      %s133 = sphi 0, %s119
      %s139 = sphi 0, %s141
      %s142 = sphi 0, %s139
      %s143 = sphi 0, %s142
      %s159 = sphi 0, %s143
    $region4: #{tpu_custom_call.1} parent=1 // loop_header_branch
      %22 = sbr.rel (%p20) target = $region8
    $region5: #{tpu_custom_call.1} parent=1 // loop_body
      %s24 = ssub.s32 %s19, 1
      %s25 = ssub.s32 %s19, 2
      %s26 = sadd.s32 %s19, 1
      %s27 = ssub.s32 %s19, %s26
      %p28 = scmp.eq.s32.totalorder %s27, 0
      %s30 = sadd.s32 %s29, 1
      %s31 = scalar_select %p28, %s29, %s30
      %p34 = pneg %p28
      %p35 = scmp.eq.s32.totalorder %s19, 1
      %p36 = por %p34, %p35
      %p37 = scmp.ne.s32.totalorder %s29, %s32
      %p38 = scmp.eq.s32.totalorder %s19, 0
      %p39 = por %p37, %p38
      %p40 = scmp.ne.s32.totalorder %s29, %s32
      %p41 = scmp.eq.s32.totalorder %s24, 1
      %p42 = por %p40, %p41
      %p43 = scmp.ne.s32.totalorder %s32, %s33
      %p44 = scmp.eq.s32.totalorder %s24, 0
      %p45 = por %p43, %p44
      %p46 = scmp.ne.s32.totalorder %s32, %s33
      %p47 = scmp.eq.s32.totalorder %s25, 1
      %p48 = por %p46, %p47
      %p50 = scmp.ne.s32.totalorder %s33, %s49
      %p51 = scmp.eq.s32.totalorder %s25, 0
      %p52 = por %p50, %p51
      %s54 = sadd.s32 %s53, 1
      %p57 = scmp.eq.s32.totalorder %s19, 1
      %p58 = scmp.ne.s32.totalorder %s53, %s55
      %p59 = scmp.eq.s32.totalorder %s19, 0
      %p60 = por %p58, %p59
      %p61 = scmp.ne.s32.totalorder %s53, %s55
      %p62 = scmp.eq.s32.totalorder %s24, 1
      %p63 = por %p61, %p62
      %p64 = scmp.ne.s32.totalorder %s55, %s56
      %p65 = scmp.eq.s32.totalorder %s24, 0
      %p66 = por %p64, %p65
      %p67 = scmp.ne.s32.totalorder %s55, %s56
      %p68 = scmp.eq.s32.totalorder %s25, 1
      %p69 = por %p67, %p68
      %p71 = scmp.ne.s32.totalorder %s56, %s70
      %p72 = scmp.eq.s32.totalorder %s25, 0
      %p73 = por %p71, %p72
      %s75 = sadd.s32 %s74, 1
      %p78 = scmp.eq.s32.totalorder %s19, 1
      %p79 = scmp.ne.s32.totalorder %s74, %s76
      %p80 = scmp.eq.s32.totalorder %s19, 0
      %p81 = por %p79, %p80
      %p82 = scmp.ne.s32.totalorder %s74, %s76
      %p83 = scmp.eq.s32.totalorder %s24, 1
      %p84 = por %p82, %p83
      %p85 = scmp.ne.s32.totalorder %s76, %s77
      %p86 = scmp.eq.s32.totalorder %s24, 0
      %p87 = por %p85, %p86
      %p88 = scmp.ne.s32.totalorder %s76, %s77
      %p89 = scmp.eq.s32.totalorder %s25, 1
      %p90 = por %p88, %p89
      %p92 = scmp.ne.s32.totalorder %s77, %s91
      %p93 = scmp.eq.s32.totalorder %s25, 0
      %p94 = por %p92, %p93
      %s96 = sadd.s32 %s95, 1
      %p99 = scmp.eq.s32.totalorder %s19, 1
      %p100 = scmp.ne.s32.totalorder %s95, %s97
      %p101 = scmp.eq.s32.totalorder %s19, 0
      %p102 = por %p100, %p101
      %p103 = scmp.ne.s32.totalorder %s95, %s97
      %p104 = scmp.eq.s32.totalorder %s24, 1
      %p105 = por %p103, %p104
      %p106 = scmp.ne.s32.totalorder %s97, %s98
      %p107 = scmp.eq.s32.totalorder %s24, 0
      %p108 = por %p106, %p107
      %p109 = scmp.ne.s32.totalorder %s97, %s98
      %p110 = scmp.eq.s32.totalorder %s25, 1
      %p111 = por %p109, %p110
      %p113 = scmp.ne.s32.totalorder %s98, %s112
      %p114 = scmp.eq.s32.totalorder %s25, 0
      %p115 = por %p113, %p114
      %s117 = sadd.s32 %s116, 1
      %p120 = scmp.eq.s32.totalorder %s19, 1
      %p121 = scmp.ne.s32.totalorder %s116, %s118
      %p122 = scmp.eq.s32.totalorder %s19, 0
      %p123 = por %p121, %p122
      %p124 = scmp.ne.s32.totalorder %s116, %s118
      %p125 = scmp.eq.s32.totalorder %s24, 1
      %p126 = por %p124, %p125
      %p127 = scmp.ne.s32.totalorder %s118, %s119
      %p128 = scmp.eq.s32.totalorder %s24, 0
      %p129 = por %p127, %p128
      %p130 = scmp.ne.s32.totalorder %s118, %s119
      %p131 = scmp.eq.s32.totalorder %s25, 1
      %p132 = por %p130, %p131
      %p134 = scmp.ne.s32.totalorder %s119, %s133
      %p135 = scmp.eq.s32.totalorder %s25, 0
      %p136 = por %p134, %p135
      %s137 = ssub.s32 %s19, %s26
      %p138 = scmp.eq.s32.totalorder %s137, 0
      %s140 = sadd.s32 %s139, 1
      %s141 = scalar_select %p138, %s139, %s140
      %p144 = pneg %p138
      %p145 = scmp.eq.s32.totalorder %s19, 1
      %p146 = por %p144, %p145
      %p147 = scmp.ne.s32.totalorder %s139, %s142
      %p148 = scmp.eq.s32.totalorder %s19, 0
      %p149 = por %p147, %p148
      %p150 = scmp.ne.s32.totalorder %s139, %s142
      %p151 = scmp.eq.s32.totalorder %s24, 1
      %p152 = por %p150, %p151
      %p153 = scmp.ne.s32.totalorder %s142, %s143
      %p154 = scmp.eq.s32.totalorder %s24, 0
      %p155 = por %p153, %p154
      %p156 = scmp.ne.s32.totalorder %s142, %s143
      %p157 = scmp.eq.s32.totalorder %s25, 1
      %p158 = por %p156, %p157
      %p160 = scmp.ne.s32.totalorder %s143, %s159
      %p161 = scmp.eq.s32.totalorder %s25, 0
      %p162 = por %p160, %p161
      %p163 = scmp.le.s32.totalorder 1, %s19
      %p164 = scmp.lt.s32.totalorder %s19, 3
      %p165 = pnand %p163, %p164
      %p166 = pneg %p165
      // Predicated region
      $region9: #{tpu_custom_call.1} parent=5 // pred_check
        _
      $region10: #{tpu_custom_call.1} parent=5 // pred_check_branch
        %168 = sbr.rel (%p165) target = $region12
      $region11: #{tpu_custom_call.1} parent=5 // pred_region
        %s169 = ssub.s32 %s19, 1
        // Predicated region
        $region13: #{tpu_custom_call.1} parent=11 // pred_check
          %p170 = pneg %p66
        $region14: #{tpu_custom_call.1} parent=11 // pred_check_branch
          %172 = sbr.rel (%p170) target = $region16
        $region15: #{tpu_custom_call.1} parent=11 // pred_region
          %174 = vsyncadd [#allocation6], 0
          %s176 = sshll.u32 %s1, 4
          %s177 = int_to_ptr.hbm [resolvable:$true] %s176
          %s178 = sshll.u32 [#allocation5], 4
          %s179 = int_to_ptr.vmem [resolvable:$true] %s178
          %181 = dma.hbm_to_vmem [thread:$0]  %s177, 128, %s179, [#allocation6]
        $region16: #{tpu_custom_call.1} parent=11 // pred_fallthru
          _
        // Predicated region
        $region17: #{tpu_custom_call.1} parent=11 // pred_check
          %p182 = pneg %p87
        $region18: #{tpu_custom_call.1} parent=11 // pred_check_branch
          %184 = sbr.rel (%p182) target = $region20
        $region19: #{tpu_custom_call.1} parent=11 // pred_region
          %186 = vsyncadd [#allocation6], 0
          %s188 = sshll.u32 %s2, 4
          %s189 = int_to_ptr.hbm [resolvable:$true] %s188
          %s190 = sshll.u32 [#allocation7], 4
          %s191 = int_to_ptr.vmem [resolvable:$true] %s190
          %193 = dma.hbm_to_vmem [thread:$0]  %s189, 32, %s191, [#allocation6]
        $region20: #{tpu_custom_call.1} parent=11 // pred_fallthru
          _
        // Predicated region
        $region21: #{tpu_custom_call.1} parent=11 // pred_check
          %p194 = pneg %p108
        $region22: #{tpu_custom_call.1} parent=11 // pred_check_branch
          %196 = sbr.rel (%p194) target = $region24
        $region23: #{tpu_custom_call.1} parent=11 // pred_region
          %198 = vsyncadd [#allocation9], 0
          %s199 = sshll.u32 %s3, 4
          %s200 = int_to_ptr.hbm [resolvable:$true] %s199
          %s201 = sshll.u32 [#allocation8], 4
          %s202 = int_to_ptr.vmem [resolvable:$true] %s201
          %207 = dma.hbm_to_vmem [thread:$0]  %s200, 4096, %s202, [#allocation9], 128, 128, 8
        $region24: #{tpu_custom_call.1} parent=11 // pred_fallthru
          _
        // Predicated region
        $region25: #{tpu_custom_call.1} parent=11 // pred_check
          %p208 = pneg %p129
        $region26: #{tpu_custom_call.1} parent=11 // pred_check_branch
          %210 = sbr.rel (%p208) target = $region28
        $region27: #{tpu_custom_call.1} parent=11 // pred_region
          _
        $region28: #{tpu_custom_call.1} parent=11 // pred_fallthru
          _
      $region12: #{tpu_custom_call.1} parent=5 // pred_fallthru
        _
      %p211 = scmp.lt.s32.totalorder %s19, 2
      // Predicated region
      $region29: #{tpu_custom_call.1} parent=5 // pred_check
        %p212 = pneg %p211
      $region30: #{tpu_custom_call.1} parent=5 // pred_check_branch
        %214 = sbr.rel (%p212) target = $region32
      $region31: #{tpu_custom_call.1} parent=5 // pred_region
        // Predicated region
        $region33: #{tpu_custom_call.1} parent=31 // pred_check
          %p215 = pneg %p39
        $region34: #{tpu_custom_call.1} parent=31 // pred_check_branch
          %217 = sbr.rel (%p215) target = $region36
        $region35: #{tpu_custom_call.1} parent=31 // pred_region
          %s218 = sand.u32 %s29, 1
          %s219 = scalar_lea.sflag [#allocation3], %s218
          %s220 = sand.u32 %s29, 1
          %s221 = smul.addr %s220, 8
          %s222 = scalar_lea.vmem [#allocation2], %s221
          %224 = vsyncadd %s219, 0
          %s225 = smul.addr %s19, 2
          %s226 = smul.addr %s225, 4
          %s227 = scalar_lea.hbm %s0, %s226
          %s229 = sshll.u32 %s227, 4
          %s230 = int_to_ptr.hbm [resolvable:$true] %s229
          %s231 = sshll.u32 %s222, 4
          %s232 = int_to_ptr.vmem [resolvable:$true] %s231
          %234 = dma.hbm_to_vmem [thread:$0]  %s230, 128, %s232, %s219
        $region36: #{tpu_custom_call.1} parent=31 // pred_fallthru
          _
      $region32: #{tpu_custom_call.1} parent=5 // pred_fallthru
        _
      %p235 = scmp.le.s32.totalorder 1, %s19
      %p236 = scmp.lt.s32.totalorder %s19, 3
      %p237 = pnand %p235, %p236
      %p238 = pneg %p237
      // Predicated region
      $region37: #{tpu_custom_call.1} parent=5 // pred_check
        _
      $region38: #{tpu_custom_call.1} parent=5 // pred_check_branch
        %240 = sbr.rel (%p237) target = $region40
      $region39: #{tpu_custom_call.1} parent=5 // pred_region
        %s241 = ssub.s32 %s19, 1
        %s242 = sand.u32 %s32, 1
        %s243 = scalar_lea.sflag [#allocation3], %s242
        %s244 = sand.u32 %s32, 1
        %s245 = smul.addr %s244, 8
        %s246 = scalar_lea.vmem [#allocation2], %s245
        // Predicated region
        $region41: #{tpu_custom_call.1} parent=39 // pred_check
          %p247 = pneg %p45
        $region42: #{tpu_custom_call.1} parent=39 // pred_check_branch
          %249 = sbr.rel (%p247) target = $region44
        $region43: #{tpu_custom_call.1} parent=39 // pred_region
          %251 = dma.done %s243, 128
        $region44: #{tpu_custom_call.1} parent=39 // pred_fallthru
          _
        // Predicated region
        $region45: #{tpu_custom_call.1} parent=39 // pred_check
          %p252 = pneg %p66
        $region46: #{tpu_custom_call.1} parent=39 // pred_check_branch
          %254 = sbr.rel (%p252) target = $region48
        $region47: #{tpu_custom_call.1} parent=39 // pred_region
          %256 = dma.done [#allocation6], 128
        $region48: #{tpu_custom_call.1} parent=39 // pred_fallthru
          _
        // Predicated region
        $region49: #{tpu_custom_call.1} parent=39 // pred_check
          %p257 = pneg %p87
        $region50: #{tpu_custom_call.1} parent=39 // pred_check_branch
          %259 = sbr.rel (%p257) target = $region52
        $region51: #{tpu_custom_call.1} parent=39 // pred_region
          %261 = dma.done [#allocation6], 32
        $region52: #{tpu_custom_call.1} parent=39 // pred_fallthru
          _
        // Predicated region
        $region53: #{tpu_custom_call.1} parent=39 // pred_check
          %p262 = pneg %p108
        $region54: #{tpu_custom_call.1} parent=39 // pred_check_branch
          %264 = sbr.rel (%p262) target = $region56
        $region55: #{tpu_custom_call.1} parent=39 // pred_region
          %266 = dma.done [#allocation9], 4096
        $region56: #{tpu_custom_call.1} parent=39 // pred_fallthru
          _
        %s267 = sand.u32 %s32, 1
        %s268 = scalar_lea.sflag [#allocation3], %s267
        %s269 = sand.u32 %s32, 1
        %s270 = smul.addr %s269, 8
        %s271 = scalar_lea.vmem [#allocation2], %s270
        %p272 = pneg %p45
        %p273 = pneg %p42
        %p274 = pneg %p66
        %p275 = pneg %p63
        %p276 = pneg %p87
        %p277 = pneg %p84
        %p278 = pneg %p108
        %p279 = pneg %p105
        %p280 = pneg %p129
        %p281 = pneg %p126
        %p282 = pneg %p155
        %p283 = pneg %p152
        %s284 = sand.u32 %s142, 1
        %s285 = scalar_lea.sflag [#allocation4], %s284
        %s286 = sand.u32 %s142, 1
        %s287 = scalar_lea.vmem [#allocation10], %s286
        %v288 = vld [vmem:[%s246] sm:$0xf]
        %v289 = vld [vmem:[%s246 + $0x4] sm:$0xf]
        %v290 = vadd.f32 %v288, %v289
        %vm291 = vcmask 1043456
        %v292 = vsel %vm291, %v290, 0.0
        %293 = vadd.xlane.f32.xlu0 %v292
        %v294 = vpop.xlane.xlu0 %293
        %v295 = vmul.f32 %v294, 0.00390625
        %v296 = vld [vmem:[#allocation5] sm:$0xff]
        %v297 = vld [vmem:[#allocation7] sm:$0x3]
        %v299 = vlaneseq
        %v300 = vand.u32 %v299, 127
        %v301 = vperm.slane %v295, %v300
        %303 = vst [vmem:[#allocation1] ss:$2 sm:$0xff] %v296
        %v304 = vld.sshfl [vmem:[#allocation1] sm:$0xff pattern:$0x75316420]
        %v305 = vld.sshfl [vmem:[#allocation1 + $0x8] sm:$0xff pattern:$0x75316420]
        %v307 = vperm.slane %v297, 0
        %v308 = vperm.slane %v297, 1
        %vm311 = vcmask 31744
        %v312 = vsel %vm311, %v301, 0
        %v314 = vsel %vm291, %v304, 0
        %v316 = vsel %vm291, %v305, 0
        %318 = vmatpush.msra.mxu0 0.0
        %319 = vmatpush.msra.mxu0 0.0
        %320 = vmatpush.msra.mxu0 0.0
        %321 = vmatpush.msra.mxu0 0.0
        %322 = vmatpush.msra.mxu0 0.0
        %323 = vmatpush.msra.mxu0 0.0
        %324 = vmatpush.msra.mxu0 0.0
        %325 = vmatpush.msra.mxu0 0.0
        %326 = vmatpush.msra.mxu0 0.0
        %327 = vmatpush.msra.mxu0 0.0
        %328 = vmatpush.msra.mxu0 0.0
        %329 = vmatpush.msra.mxu0 0.0
        %330 = vmatpush.msra.mxu0 0.0
        %331 = vmatpush.msra.mxu0 0.0
        %332 = vmatpush.msra.mxu0 0.0
        %333 = vmatpush.msra.mxu0 %v314
        %334 = vmatmul.f32.gmra.mxu0 %v312
        %v335 = vpop.f32.mrf.mxu0
        %v336 = vadd.f32 %v307, %v335
        %337 = vdwg.mxu0
        %338 = vmatpush.msra.mxu0 0.0
        %339 = vmatpush.msra.mxu0 0.0
        %340 = vmatpush.msra.mxu0 0.0
        %341 = vmatpush.msra.mxu0 0.0
        %342 = vmatpush.msra.mxu0 0.0
        %343 = vmatpush.msra.mxu0 0.0
        %344 = vmatpush.msra.mxu0 0.0
        %345 = vmatpush.msra.mxu0 0.0
        %346 = vmatpush.msra.mxu0 0.0
        %347 = vmatpush.msra.mxu0 0.0
        %348 = vmatpush.msra.mxu0 0.0
        %349 = vmatpush.msra.mxu0 0.0
        %350 = vmatpush.msra.mxu0 0.0
        %351 = vmatpush.msra.mxu0 0.0
        %352 = vmatpush.msra.mxu0 0.0
        %353 = vmatpush.msra.mxu0 %v316
        %354 = vmatmul.f32.gmra.mxu0 %v312
        %v355 = vpop.f32.mrf.mxu0
        %v356 = vadd.f32 %v308, %v355
        %357 = vdwg.mxu0
        %v358 = vmax.f32 %v336, 0.0
        %v359 = vmax.f32 %v356, 0.0
        %v360 = vld [vmem:[#allocation8] sm:$0xff]
        %v361 = vld [vmem:[#allocation8 + $0x8] sm:$0xff]
        %v362 = vld [vmem:[#allocation8 + $0x10] sm:$0xff]
        %v363 = vld [vmem:[#allocation8 + $0x18] sm:$0xff]
        %v364 = vld [vmem:[#allocation8 + $0x20] sm:$0xff]
        %v365 = vld [vmem:[#allocation8 + $0x28] sm:$0xff]
        %v366 = vld [vmem:[#allocation8 + $0x30] sm:$0xff]
        %v367 = vld [vmem:[#allocation8 + $0x38] sm:$0xff]
        %v368 = vld [vmem:[#allocation8 + $0x40] sm:$0xff]
        %v369 = vld [vmem:[#allocation8 + $0x48] sm:$0xff]
        %v370 = vld [vmem:[#allocation8 + $0x50] sm:$0xff]
        %v371 = vld [vmem:[#allocation8 + $0x58] sm:$0xff]
        %v372 = vld [vmem:[#allocation8 + $0x60] sm:$0xff]
        %v373 = vld [vmem:[#allocation8 + $0x68] sm:$0xff]
        %v374 = vld [vmem:[#allocation8 + $0x70] sm:$0xff]
        %v375 = vld [vmem:[#allocation8 + $0x78] sm:$0xff]
        %v376 = vld [vmem:[#allocation8 + $0x80] sm:$0xff]
        %v377 = vld [vmem:[#allocation8 + $0x88] sm:$0xff]
        %v378 = vld [vmem:[#allocation8 + $0x90] sm:$0xff]
        %v379 = vld [vmem:[#allocation8 + $0x98] sm:$0xff]
        %v380 = vld [vmem:[#allocation8 + $0xa0] sm:$0xff]
        %v381 = vld [vmem:[#allocation8 + $0xa8] sm:$0xff]
        %v382 = vld [vmem:[#allocation8 + $0xb0] sm:$0xff]
        %v383 = vld [vmem:[#allocation8 + $0xb8] sm:$0xff]
        %v384 = vld [vmem:[#allocation8 + $0xc0] sm:$0xff]
        %v385 = vld [vmem:[#allocation8 + $0xc8] sm:$0xff]
        %v386 = vld [vmem:[#allocation8 + $0xd0] sm:$0xff]
        %v387 = vld [vmem:[#allocation8 + $0xd8] sm:$0xff]
        %v388 = vld [vmem:[#allocation8 + $0xe0] sm:$0xff]
        %v389 = vld [vmem:[#allocation8 + $0xe8] sm:$0xff]
        %v390 = vld [vmem:[#allocation8 + $0xf0] sm:$0xff]
        %v391 = vld [vmem:[#allocation8 + $0xf8] sm:$0xff]
        %v392 = vld [vmem:[%s4] sm:$0x1]
        %393 = vmatpush.msra.mxu0 %v375
        %394 = vmatpush.msra.mxu0 %v374
        %395 = vmatpush.msra.mxu0 %v373
        %396 = vmatpush.msra.mxu0 %v372
        %397 = vmatpush.msra.mxu0 %v371
        %398 = vmatpush.msra.mxu0 %v370
        %399 = vmatpush.msra.mxu0 %v369
        %400 = vmatpush.msra.mxu0 %v368
        %401 = vmatpush.msra.mxu0 %v367
        %402 = vmatpush.msra.mxu0 %v366
        %403 = vmatpush.msra.mxu0 %v365
        %404 = vmatpush.msra.mxu0 %v364
        %405 = vmatpush.msra.mxu0 %v363
        %406 = vmatpush.msra.mxu0 %v362
        %407 = vmatpush.msra.mxu0 %v361
        %408 = vmatpush.msra.mxu0 %v360
        %409 = vmatmul.f32.gmra.mxu0 %v358
        %v410 = vpop.f32.mrf.mxu0
        %v411 = vadd.f32 %v392, %v410
        %412 = vdwg.mxu0
        %413 = vmatpush.msra.mxu0 %v391
        %414 = vmatpush.msra.mxu0 %v390
        %415 = vmatpush.msra.mxu0 %v389
        %416 = vmatpush.msra.mxu0 %v388
        %417 = vmatpush.msra.mxu0 %v387
        %418 = vmatpush.msra.mxu0 %v386
        %419 = vmatpush.msra.mxu0 %v385
        %420 = vmatpush.msra.mxu0 %v384
        %421 = vmatpush.msra.mxu0 %v383
        %422 = vmatpush.msra.mxu0 %v382
        %423 = vmatpush.msra.mxu0 %v381
        %424 = vmatpush.msra.mxu0 %v380
        %425 = vmatpush.msra.mxu0 %v379
        %426 = vmatpush.msra.mxu0 %v378
        %427 = vmatpush.msra.mxu0 %v377
        %428 = vmatpush.msra.mxu0 %v376
        %429 = vmatmul.f32.gmra.mxu0 %v359
        %v430 = vpop.f32.mrf.mxu0
        %v431 = vadd.f32 %v411, %v430
        %432 = vdwg.mxu0
        %433 = vst [vmem:[%s287] sm:$0x1] %v431
        %s434 = sand.u32 %s142, 1
        %s435 = scalar_lea.sflag [#allocation4], %s434
        %s436 = sand.u32 %s142, 1
        %s437 = scalar_lea.vmem [#allocation10], %s436
        // Predicated region
        $region57: #{tpu_custom_call.1} parent=39 // pred_check
          %p438 = pneg %p152
        $region58: #{tpu_custom_call.1} parent=39 // pred_check_branch
          %440 = sbr.rel (%p438) target = $region60
        $region59: #{tpu_custom_call.1} parent=39 // pred_region
          %442 = vsyncadd %s435, 0
          %s443 = scalar_lea.hbm %s5, %s24
          %s445 = sshll.u32 %s437, 4
          %s446 = int_to_ptr.vmem [resolvable:$true] %s445
          %s447 = sshll.u32 %s443, 4
          %s448 = int_to_ptr.hbm [resolvable:$true] %s447
          %450 = dma.vmem_to_hbm [thread:$0]  %s446, 16, %s448, %s435
        $region60: #{tpu_custom_call.1} parent=39 // pred_fallthru
          _
      $region40: #{tpu_custom_call.1} parent=5 // pred_fallthru
        _
      %p451 = scmp.le.s32.totalorder 2, %s19
      // Predicated region
      $region61: #{tpu_custom_call.1} parent=5 // pred_check
        %p452 = pneg %p451
      $region62: #{tpu_custom_call.1} parent=5 // pred_check_branch
        %454 = sbr.rel (%p452) target = $region64
      $region63: #{tpu_custom_call.1} parent=5 // pred_region
        %s455 = ssub.s32 %s19, 2
        // Predicated region
        $region65: #{tpu_custom_call.1} parent=63 // pred_check
          %p456 = pneg %p158
        $region66: #{tpu_custom_call.1} parent=63 // pred_check_branch
          %458 = sbr.rel (%p456) target = $region68
        $region67: #{tpu_custom_call.1} parent=63 // pred_region
          %s459 = sand.u32 %s143, 1
          %s460 = scalar_lea.sflag [#allocation4], %s459
          %s461 = sand.u32 %s143, 1
          %s462 = scalar_lea.vmem [#allocation10], %s461
          %464 = dma.done %s460, 16
        $region68: #{tpu_custom_call.1} parent=63 // pred_fallthru
          _
      $region64: #{tpu_custom_call.1} parent=5 // pred_fallthru
        _
    $region6: #{tpu_custom_call.1} parent=1 // loop_footer
      %s23 = sadd.s32 1, %s19
    $region7: #{tpu_custom_call.1} parent=1 // loop_footer_branch
      %18 = sbr.rel target = $region3
    $region8: #{tpu_custom_call.1} parent=1 // loop_exit
      _
    %465 = vsyncpa [#allocation3], 1
    %s466 = scalar_lea.sflag [#allocation3], 1
    %467 = vsyncpa %s466, 1
    %468 = vsyncpa [#allocation6], 1
    %469 = vsyncpa [#allocation9], 1
    %470 = vsyncpa [#allocation4], 1
    %s471 = scalar_lea.sflag [#allocation4], 1
    %472 = vsyncpa %s471, 1

</llo_original>
